<compile_context>
chip_gen: v7x
topology: tpu7x:2x2x1
jax: 0.10.0
libtpu: 0.0.40
codegen_flags: <defaults>
</compile_context>

<pallas_src>
import numpy as np
import jax
import jax.numpy as jnp
from jax.experimental import pallas as pl
from jax.experimental.pallas import tpu as pltpu


def _deconv_kernel(x_ref, w_ref, b_ref, o_ref):
    # x_ref: (K, T)   w_ref: (M, K)   b_ref: (M, 1)   o_ref: (M, T)
    acc = jnp.dot(w_ref[...], x_ref[...], preferred_element_type=jnp.float32)
    o_ref[...] = (acc + b_ref[...]).astype(o_ref.dtype)


def _choose_hw_tile(hw, cap=8192):
    """Lane-tile size and padded HW: tile % 128 == 0, tile <= cap, tile | hw_pad."""
    hw_pad = pl.cdiv(hw, 128) * 128
    if hw_pad <= cap:
        return hw_pad, hw_pad              # single lane-dense tile along HW
    tile = (cap // 128) * 128
    hw_pad = pl.cdiv(hw_pad, tile) * tile
    return tile, hw_pad


def build_block_weight(weight, bias, stride_d, d_in, dtype):
    """Dense block weight W_big[(co,do),(ci,di)] = weight[ci,co,do-di*s] (0 outside taps).

    Rows are C_out-major / D_out-minor, cols C_in-major / D_in-minor so the data
    reshapes in the wrapper are free.  Built with a single einsum against a
    static (numpy) one-hot scatter matrix; depends only on weight/bias, so in a
    real model this is hoisted out of the per-call path.
    """
    c_in, c_out, kd = weight.shape[0], weight.shape[1], weight.shape[2]
    d_out = (d_in - 1) * stride_d + kd
    scat = np.zeros((kd, d_in, d_out), dtype=np.float32)          # S[k, di, do]
    k_idx, di_idx = np.meshgrid(np.arange(kd), np.arange(d_in), indexing="ij")
    scat[k_idx, di_idx, di_idx * stride_d + k_idx] = 1.0
    w = weight[..., 0, 0].astype(jnp.float32)                     # (C_in, C_out, KD)
    # W_big[co, do, ci, di] = sum_k w[ci, co, k] * S[k, di, do]
    w_big = jnp.einsum("iok,kdq->oqid", w, jnp.asarray(scat))
    w_big = w_big.reshape(c_out * d_out, c_in * d_in).astype(dtype)
    # Row index = co*D_out + do  ->  bias[co]  (repeat, NOT tile, for C_out-major rows).
    b_big = jnp.repeat(bias.astype(jnp.float32), d_out).reshape(c_out * d_out, 1)
    return w_big, b_big, d_out


def dimension_transform_deconv3d(x, weight, bias, stride_d, *, lane_cap=8192):
    """x: (N, C_in, D_in, H, W); weight: (C_in, C_out, KD, 1, 1); bias: (C_out,)."""
    N, C_in, D_in, H, W = x.shape
    _, C_out, KD, _, _ = weight.shape

    w_big, b_big, D_out = build_block_weight(weight, bias, stride_d, D_in, x.dtype)
    M = C_out * D_out            # output rows (co-major, do-minor)
    K = C_in * D_in              # contraction (ci-major, di-minor)
    HW = H * W

    # Free reshape: (N, C_in, D_in, H, W) -> (N, K, HW) (contiguous, no transpose).
    x_flat = x.reshape(N, K, HW)

    hw_tile, hw_pad = _choose_hw_tile(HW, lane_cap)
    if hw_pad != HW:
        x_flat = jnp.pad(x_flat, ((0, 0), (0, 0), (0, hw_pad - HW)))

    grid = (N, hw_pad // hw_tile)
    itemsize = jnp.dtype(x.dtype).itemsize
    cost = pl.CostEstimate(
        flops=2 * N * M * K * hw_pad + N * M * hw_pad,
        transcendentals=0,
        bytes_accessed=(N * K * hw_pad * itemsize        # x
                        + M * K * itemsize               # W_big
                        + M * 4                          # bias
                        + N * M * hw_pad * itemsize),    # out
    )

    out_flat = pl.pallas_call(
        _deconv_kernel,
        out_shape=jax.ShapeDtypeStruct((N, M, hw_pad), x.dtype),
        grid=grid,
        in_specs=[
            pl.BlockSpec((None, K, hw_tile), lambda n, j: (n, 0, j)),   # x tile
            pl.BlockSpec((M, K), lambda n, j: (0, 0)),                  # resident weight
            pl.BlockSpec((M, 1), lambda n, j: (0, 0)),                  # resident bias
        ],
        out_specs=pl.BlockSpec((None, M, hw_tile), lambda n, j: (n, 0, j)),
        compiler_params=pltpu.CompilerParams(
            dimension_semantics=("parallel", "parallel")),
        cost_estimate=cost,
    )(x_flat, w_big, b_big)

    if hw_pad != HW:
        out_flat = out_flat[:, :, :HW]
    # Free reshape: rows are C_out-major / D_out-minor.
    return out_flat.reshape(N, C_out, D_out, H, W)


def _reference_deconv(x, weight, bias, stride_d):
    """Plain-JAX reference (same semantics as nn.ConvTranspose3d with k=(4,1,1))."""
    N, C_in, D_in, H, W = x.shape
    _, C_out, KD, _, _ = weight.shape
    D_out = (D_in - 1) * stride_d + KD
    out = jnp.zeros((N, C_out, D_out, H, W), jnp.float32) + bias.reshape(1, C_out, 1, 1, 1)
    for di in range(D_in):
        for kd in range(KD):
            contrib = jnp.einsum("nihw,io->nohw", x[:, :, di], weight[:, :, kd, 0, 0])
            out = out.at[:, :, di * stride_d + kd].add(contrib)
    return out.astype(x.dtype)


if __name__ == "__main__":
    # Module config: in_planes=4, out_planes=8, feature_dim=(5, ..., 16) -> stride=3, kernel=4
    in_planes, out_planes = 4, 8
    feature_dim = (5, 16, 16)
    feature_dim_0, feature_dim_uniform = feature_dim[0], feature_dim[-1]
    if feature_dim_0 == 5 and feature_dim_uniform == 16:
        stride_d, KD = 3, 4
    elif feature_dim_0 == 5 and feature_dim_uniform == 12:
        stride_d, KD = 2, 4
    else:
        raise AssertionError("unsupported feature_dim")

    N, D_in, H, W = 2, feature_dim_0, 8, 16   # H*W = 128 -> lane-dense tiles, grid (2, 1)

    key = jax.random.PRNGKey(0)
    kx, kw, kb = jax.random.split(key, 3)
    x = jax.random.normal(kx, (N, in_planes, D_in, H, W), dtype=jnp.float32)
    # PyTorch weight layout for ConvTranspose3d: (C_in, C_out, kD, kH, kW).
    weight = 0.1 * jax.random.normal(
        kw, (in_planes, out_planes, KD, 1, 1), dtype=jnp.float32)
    bias = 0.1 * jax.random.normal(kb, (out_planes,), dtype=jnp.float32)

    out = dimension_transform_deconv3d(x, weight, bias, stride_d)
    out = jax.block_until_ready(out)

    ref = _reference_deconv(x, weight, bias, stride_d)
    assert out.shape == (N, out_planes, (D_in - 1) * stride_d + KD, H, W)
    assert jnp.allclose(out, ref, atol=1e-4, rtol=1e-4), "mismatch vs reference"

    print("KERNEL_OK")
</pallas_src>

<mosaic_0001>
module attributes {stable_mosaic.version = 11 : i64} {
  func.func @_deconv_kernel(%arg0: i32, %arg1: i32, %arg2: memref<1x20x128xf32, #tpu.memory_space<vmem>>, %arg3: memref<128x20xf32, #tpu.memory_space<vmem>>, %arg4: memref<128x1xf32, #tpu.memory_space<vmem>>, %arg5: memref<1x128x128xf32, #tpu.memory_space<vmem>>) attributes {dimension_semantics = [#tpu.dimension_semantics<parallel>, #tpu.dimension_semantics<parallel>], iteration_bounds = array<i64: 2, 1>, scalar_prefetch = 0 : i64, scratch_operands = 0 : i64, tpu.core_type = #tpu.core_type<tc>, window_params = [{transform_indices = @transform_0, window_bounds = array<i64: 1, 20, 128>}, {pipeline_mode = #tpu.pipeline_mode<synchronous>, transform_indices = @transform_1, window_bounds = array<i64: 128, 20>}, {pipeline_mode = #tpu.pipeline_mode<synchronous>, transform_indices = @transform_2, window_bounds = array<i64: 128, 1>}, {transform_indices = @transform_3, window_bounds = array<i64: 1, 128, 128>}]} {
    %c0 = arith.constant 0 : index
    %c0_0 = arith.constant 0 : index
    %0 = vector.load %arg3[%c0, %c0_0] : memref<128x20xf32, #tpu.memory_space<vmem>>, vector<128x20xf32>
    %c0_1 = arith.constant 0 : index
    %c0_2 = arith.constant 0 : index
    %c0_3 = arith.constant 0 : index
    %1 = vector.load %arg2[%c0_1, %c0_2, %c0_3] : memref<1x20x128xf32, #tpu.memory_space<vmem>>, vector<1x20x128xf32>
    %2 = vector.shape_cast %1 : vector<1x20x128xf32> to vector<20x128xf32>
    %cst = arith.constant dense<0.000000e+00> : vector<128x128xf32>
    %3 = tpu.matmul %0, %2, %cst {dimension_numbers = #tpu.dot_dimension_numbers<[1], [0], [0], [1], [0, 0, 1, 1], [], []>} : vector<128x20xf32>, vector<20x128xf32>, vector<128x128xf32> -> vector<128x128xf32>
    %c0_4 = arith.constant 0 : index
    %c0_5 = arith.constant 0 : index
    %4 = vector.load %arg4[%c0_4, %c0_5] : memref<128x1xf32, #tpu.memory_space<vmem>>, vector<128x1xf32>
    %5 = vector.broadcast %4 : vector<128x1xf32> to vector<128x128xf32>
    %6 = arith.addf %3, %5 : vector<128x128xf32>
    %c0_6 = arith.constant 0 : index
    %c0_7 = arith.constant 0 : index
    %c0_8 = arith.constant 0 : index
    %7 = vector.load %arg5[%c0_6, %c0_7, %c0_8] : memref<1x128x128xf32, #tpu.memory_space<vmem>>, vector<1x128x128xf32>
    %8 = vector.shape_cast %7 : vector<1x128x128xf32> to vector<128x128xf32>
    %9 = vector.shape_cast %6 : vector<128x128xf32> to vector<1x128x128xf32>
    tpu.vector_store %arg5[%c0_6, %c0_7, %c0_8], %9 {strides = array<i32>} : memref<1x128x128xf32, #tpu.memory_space<vmem>>, vector<1x128x128xf32>,
    return
  }
  func.func @transform_0(%arg0: i32, %arg1: i32) -> (i32, i32, i32) {
    %c0_i32 = arith.constant 0 : i32
    %c0_i32_0 = arith.constant 0 : i32
    return %arg0, %c0_i32, %arg1 : i32, i32, i32
  }
  func.func @transform_1(%arg0: i32, %arg1: i32) -> (i32, i32) {
    %c0_i32 = arith.constant 0 : i32
    %c0_i32_0 = arith.constant 0 : i32
    %c0_i32_1 = arith.constant 0 : i32
    return %c0_i32, %c0_i32_0 : i32, i32
  }
  func.func @transform_2(%arg0: i32, %arg1: i32) -> (i32, i32) {
    %c0_i32 = arith.constant 0 : i32
    %c0_i32_0 = arith.constant 0 : i32
    %c0_i32_1 = arith.constant 0 : i32
    return %c0_i32, %c0_i32_0 : i32, i32
  }
  func.func @transform_3(%arg0: i32, %arg1: i32) -> (i32, i32, i32) {
    %c0_i32 = arith.constant 0 : i32
    %c0_i32_0 = arith.constant 0 : i32
    return %arg0, %c0_i32, %arg1 : i32, i32, i32
  }
}

</mosaic_0001>

<llo_original>
// kernel: tpu_custom_call.1
$region0: #{tpu_custom_call.1}
  #allocation0 [shape = 'u32[]', space=smem, size = 0x4, offset = 0x4, fixed_abs, tag = 'smem constant byte address 0x4 - core index']
  #allocation1 [shape = 'u32[144,128]{1,0:T(1,128)}', space=vmem, size = 0x12000, scoped, tag = 'internal scratch']
  %s0 = inlined_call_operand.vmem [shape: f32[2,20,128], index: 0, kind: input, shape index: {}]
  %s1 = inlined_call_operand.vmem [shape: f32[128,20], index: 1, kind: input, shape index: {}]
  %s2 = inlined_call_operand.vmem [shape: f32[128,1], index: 2, kind: input, shape index: {}]
  %s3 = inlined_call_operand.hbm [shape: f32[2,128,128], index: 3, kind: output, shape index: {}]
  %s4 = sld [smem:[#allocation0]]
  $region45: #{tpu_custom_call.1} parent=0
    _
  %s6 = ssub.s32 1, %s4
  %s7 = scalar_select 0, %s6, %s4
  $region1: #{tpu_custom_call.1} parent=0
    #allocation2 [shape = 'u8[131072]{0}', space=vmem, size = 0x20000, scoped, tag = 'output window, operand 0']
    #allocation3 [shape = 's32[2]{0}', space=sflag, size = 0x8, scoped, tag = 'scoped memory for tpu_custom_call.1']
    %8 = vsyncpa [#allocation3], 0
    %s9 = scalar_lea.sflag [#allocation3], 1
    %10 = vsyncpa %s9, 0
    loop: start=0, step=1, limit=4
    $region2: #{tpu_custom_call.1} parent=1 // loop_pre_header
      _
    $region3: #{tpu_custom_call.1} parent=1 // loop_header
      %s12 = sphi 0, %s16
      %p13 = scmp.ge.s32.totalorder %s12, 4
      %s19 = sphi 0, %s31
      %s20 = sphi 0, %s27
      %s21 = sphi 0, %s19
      %s22 = sphi 0, %s20
      %s23 = sphi 0, %s21
      %s24 = sphi 0, %s22
      %s36 = sphi 0, %s38
      %s39 = sphi 0, %s36
      %s40 = sphi 0, %s39
      %s56 = sphi 0, %s40
      %s60 = sphi 0, %s60
      %s62 = sphi 0, %s60
      %s63 = sphi 0, %s62
      %s77 = sphi 0, %s63
      %s81 = sphi 0, %s81
      %s83 = sphi 0, %s81
      %s84 = sphi 0, %s83
      %s98 = sphi 0, %s84
      %s106 = sphi 0, %s108
      %s109 = sphi 0, %s106
      %s110 = sphi 0, %s109
      %s126 = sphi 0, %s110
    $region4: #{tpu_custom_call.1} parent=1 // loop_header_branch
      %15 = sbr.rel (%p13) target = $region8
    $region5: #{tpu_custom_call.1} parent=1 // loop_body
      %s17 = ssub.s32 %s12, 1
      %s18 = ssub.s32 %s12, 2
      %s25 = sadd.s32 1, %s20
      %p26 = scmp.ge.s32.totalorder %s25, 1
      %s27 = scalar_select %p26, 0, %s25
      %s28 = sadd.s32 1, %s19
      %s29 = scalar_select %p26, %s28, %s19
      %p30 = scmp.ge.s32.totalorder %s29, 2
      %s31 = scalar_select %p30, 0, %s29
      %s32 = ssub.s32 %s19, %s31
      %s33 = ssub.s32 %s20, %s27
      %s34 = sor.u32 %s32, %s33
      %p35 = scmp.eq.s32.totalorder %s34, 0
      %s37 = sadd.s32 %s36, 1
      %s38 = scalar_select %p35, %s36, %s37
      %p41 = pneg %p35
      %p42 = scmp.eq.s32.totalorder %s12, 1
      %p43 = por %p41, %p42
      %p44 = scmp.ne.s32.totalorder %s36, %s39
      %p45 = scmp.eq.s32.totalorder %s12, 0
      %p46 = por %p44, %p45
      %p47 = scmp.ne.s32.totalorder %s36, %s39
      %p48 = scmp.eq.s32.totalorder %s17, 1
      %p49 = por %p47, %p48
      %p50 = scmp.ne.s32.totalorder %s39, %s40
      %p51 = scmp.eq.s32.totalorder %s17, 0
      %p52 = por %p50, %p51
      %p53 = scmp.ne.s32.totalorder %s39, %s40
      %p54 = scmp.eq.s32.totalorder %s18, 1
      %p55 = por %p53, %p54
      %p57 = scmp.ne.s32.totalorder %s40, %s56
      %p58 = scmp.eq.s32.totalorder %s18, 0
      %p59 = por %p57, %p58
      %s61 = sadd.s32 %s60, 1
      %p64 = scmp.eq.s32.totalorder %s12, 1
      %p65 = scmp.ne.s32.totalorder %s60, %s62
      %p66 = scmp.eq.s32.totalorder %s12, 0
      %p67 = por %p65, %p66
      %p68 = scmp.ne.s32.totalorder %s60, %s62
      %p69 = scmp.eq.s32.totalorder %s17, 1
      %p70 = por %p68, %p69
      %p71 = scmp.ne.s32.totalorder %s62, %s63
      %p72 = scmp.eq.s32.totalorder %s17, 0
      %p73 = por %p71, %p72
      %p74 = scmp.ne.s32.totalorder %s62, %s63
      %p75 = scmp.eq.s32.totalorder %s18, 1
      %p76 = por %p74, %p75
      %p78 = scmp.ne.s32.totalorder %s63, %s77
      %p79 = scmp.eq.s32.totalorder %s18, 0
      %p80 = por %p78, %p79
      %s82 = sadd.s32 %s81, 1
      %p85 = scmp.eq.s32.totalorder %s12, 1
      %p86 = scmp.ne.s32.totalorder %s81, %s83
      %p87 = scmp.eq.s32.totalorder %s12, 0
      %p88 = por %p86, %p87
      %p89 = scmp.ne.s32.totalorder %s81, %s83
      %p90 = scmp.eq.s32.totalorder %s17, 1
      %p91 = por %p89, %p90
      %p92 = scmp.ne.s32.totalorder %s83, %s84
      %p93 = scmp.eq.s32.totalorder %s17, 0
      %p94 = por %p92, %p93
      %p95 = scmp.ne.s32.totalorder %s83, %s84
      %p96 = scmp.eq.s32.totalorder %s18, 1
      %p97 = por %p95, %p96
      %p99 = scmp.ne.s32.totalorder %s84, %s98
      %p100 = scmp.eq.s32.totalorder %s18, 0
      %p101 = por %p99, %p100
      %s102 = ssub.s32 %s19, %s31
      %s103 = ssub.s32 %s20, %s27
      %s104 = sor.u32 %s102, %s103
      %p105 = scmp.eq.s32.totalorder %s104, 0
      %s107 = sadd.s32 %s106, 1
      %s108 = scalar_select %p105, %s106, %s107
      %p111 = pneg %p105
      %p112 = scmp.eq.s32.totalorder %s12, 1
      %p113 = por %p111, %p112
      %p114 = scmp.ne.s32.totalorder %s106, %s109
      %p115 = scmp.eq.s32.totalorder %s12, 0
      %p116 = por %p114, %p115
      %p117 = scmp.ne.s32.totalorder %s106, %s109
      %p118 = scmp.eq.s32.totalorder %s17, 1
      %p119 = por %p117, %p118
      %p120 = scmp.ne.s32.totalorder %s109, %s110
      %p121 = scmp.eq.s32.totalorder %s17, 0
      %p122 = por %p120, %p121
      %p123 = scmp.ne.s32.totalorder %s109, %s110
      %p124 = scmp.eq.s32.totalorder %s18, 1
      %p125 = por %p123, %p124
      %p127 = scmp.ne.s32.totalorder %s110, %s126
      %p128 = scmp.eq.s32.totalorder %s18, 0
      %p129 = por %p127, %p128
      %p130 = scmp.le.s32.totalorder 1, %s12
      %p131 = scmp.lt.s32.totalorder %s12, 3
      %p132 = pnand %p130, %p131
      %p133 = pneg %p132
      // Predicated region
      $region9: #{tpu_custom_call.1} parent=5 // pred_check
        _
      $region10: #{tpu_custom_call.1} parent=5 // pred_check_branch
        %135 = sbr.rel (%p132) target = $region12
      $region11: #{tpu_custom_call.1} parent=5 // pred_region
        %s136 = ssub.s32 %s12, 1
        // Predicated region
        $region13: #{tpu_custom_call.1} parent=11 // pred_check
          %p137 = pneg %p73
        $region14: #{tpu_custom_call.1} parent=11 // pred_check_branch
          %139 = sbr.rel (%p137) target = $region16
        $region15: #{tpu_custom_call.1} parent=11 // pred_region
          _
        $region16: #{tpu_custom_call.1} parent=11 // pred_fallthru
          _
        // Predicated region
        $region17: #{tpu_custom_call.1} parent=11 // pred_check
          %p140 = pneg %p94
        $region18: #{tpu_custom_call.1} parent=11 // pred_check_branch
          %142 = sbr.rel (%p140) target = $region20
        $region19: #{tpu_custom_call.1} parent=11 // pred_region
          _
        $region20: #{tpu_custom_call.1} parent=11 // pred_fallthru
          _
      $region12: #{tpu_custom_call.1} parent=5 // pred_fallthru
        _
      %p143 = scmp.lt.s32.totalorder %s12, 2
      // Predicated region
      $region21: #{tpu_custom_call.1} parent=5 // pred_check
        %p144 = pneg %p143
      $region22: #{tpu_custom_call.1} parent=5 // pred_check_branch
        %146 = sbr.rel (%p144) target = $region24
      $region23: #{tpu_custom_call.1} parent=5 // pred_region
        // Predicated region
        $region25: #{tpu_custom_call.1} parent=23 // pred_check
          %p147 = pneg %p46
        $region26: #{tpu_custom_call.1} parent=23 // pred_check_branch
          %149 = sbr.rel (%p147) target = $region28
        $region27: #{tpu_custom_call.1} parent=23 // pred_region
          %p150 = scmp.lt.s32.totalorder %s19, 1
          %s151 = scalar_select %p150, %s19, 1
          %p152 = scmp.lt.s32.totalorder %s20, 0
          %s153 = scalar_select %p152, %s20, 0
          %s154 = smul.addr %s151, 3
          %s155 = sadd.s32 %s153, %s154
          %s156 = smul.addr %s155, 8
          %s157 = scalar_lea.vmem %s0, %s156
        $region28: #{tpu_custom_call.1} parent=23 // pred_fallthru
          _
      $region24: #{tpu_custom_call.1} parent=5 // pred_fallthru
        _
      %p158 = scmp.le.s32.totalorder 1, %s12
      %p159 = scmp.lt.s32.totalorder %s12, 3
      %p160 = pnand %p158, %p159
      %p161 = pneg %p160
      // Predicated region
      $region29: #{tpu_custom_call.1} parent=5 // pred_check
        _
      $region30: #{tpu_custom_call.1} parent=5 // pred_check_branch
        %163 = sbr.rel (%p160) target = $region32
      $region31: #{tpu_custom_call.1} parent=5 // pred_region
        %s164 = ssub.s32 %s12, 1
        %p165 = scmp.lt.s32.totalorder %s21, 1
        %s166 = scalar_select %p165, %s21, 1
        %p167 = scmp.lt.s32.totalorder %s22, 0
        %s168 = scalar_select %p167, %s22, 0
        %s169 = smul.addr %s166, 3
        %s170 = sadd.s32 %s168, %s169
        %s171 = smul.addr %s170, 8
        %s172 = scalar_lea.vmem %s0, %s171
        %p173 = pneg %p52
        %p174 = pneg %p49
        %p175 = pneg %p73
        %p176 = pneg %p70
        %p177 = pneg %p94
        %p178 = pneg %p91
        %p179 = pneg %p122
        %p180 = pneg %p119
        %s181 = sand.u32 %s109, 1
        %s182 = scalar_lea.sflag [#allocation3], %s181
        %s183 = sand.u32 %s109, 1
        %s184 = smul.addr %s183, 128
        %s185 = scalar_lea.vmem [#allocation2], %s184
        %p186 = scmp.lt.s32.totalorder %s21, 1
        %s187 = scalar_select %p186, %s21, 1
        %p188 = scmp.lt.s32.totalorder %s22, 0
        %s189 = scalar_select %p188, %s22, 0
        %s190 = smul.addr %s187, 3
        %s191 = sadd.s32 %s189, %s190
        %s192 = smul.addr %s191, 8
        %s193 = scalar_lea.vmem %s0, %s192
        %v194 = vld [vmem:[%s1] sm:$0xff]
        %v195 = vld [vmem:[%s1 + $0x8] sm:$0xff]
        %v196 = vld [vmem:[%s1 + $0x10] sm:$0xff]
        %v197 = vld [vmem:[%s1 + $0x18] sm:$0xff]
        %v198 = vld [vmem:[%s1 + $0x20] sm:$0xff]
        %v199 = vld [vmem:[%s1 + $0x28] sm:$0xff]
        %v200 = vld [vmem:[%s1 + $0x30] sm:$0xff]
        %v201 = vld [vmem:[%s1 + $0x38] sm:$0xff]
        %v202 = vld [vmem:[%s1 + $0x40] sm:$0xff]
        %v203 = vld [vmem:[%s1 + $0x48] sm:$0xff]
        %v204 = vld [vmem:[%s1 + $0x50] sm:$0xff]
        %v205 = vld [vmem:[%s1 + $0x58] sm:$0xff]
        %v206 = vld [vmem:[%s1 + $0x60] sm:$0xff]
        %v207 = vld [vmem:[%s1 + $0x68] sm:$0xff]
        %v208 = vld [vmem:[%s1 + $0x70] sm:$0xff]
        %v209 = vld [vmem:[%s1 + $0x78] sm:$0xff]
        %v210 = vld [vmem:[%s193] sm:$0xff]
        %v211 = vld [vmem:[%s193 + $0x8] sm:$0xff]
        %v212 = vld [vmem:[%s193 + $0x10] sm:$0xf]
        %v213 = vld [vmem:[%s2] sm:$0xff]
        %v214 = vld [vmem:[%s2 + $0x8] sm:$0xff]
        %v215 = vld [vmem:[%s2 + $0x10] sm:$0xff]
        %v216 = vld [vmem:[%s2 + $0x18] sm:$0xff]
        %v217 = vld [vmem:[%s2 + $0x20] sm:$0xff]
        %v218 = vld [vmem:[%s2 + $0x28] sm:$0xff]
        %v219 = vld [vmem:[%s2 + $0x30] sm:$0xff]
        %v220 = vld [vmem:[%s2 + $0x38] sm:$0xff]
        %v221 = vld [vmem:[%s2 + $0x40] sm:$0xff]
        %v222 = vld [vmem:[%s2 + $0x48] sm:$0xff]
        %v223 = vld [vmem:[%s2 + $0x50] sm:$0xff]
        %v224 = vld [vmem:[%s2 + $0x58] sm:$0xff]
        %v225 = vld [vmem:[%s2 + $0x60] sm:$0xff]
        %v226 = vld [vmem:[%s2 + $0x68] sm:$0xff]
        %v227 = vld [vmem:[%s2 + $0x70] sm:$0xff]
        %v228 = vld [vmem:[%s2 + $0x78] sm:$0xff]
        %230 = vset.pattern.permute.xlu0 0
        %231 = vperm.xlu0 %230, %v213
        %v232 = vpop.permute.xlu0 %231
        %235 = vset.pattern.permute.xlu0 0
        %236 = vperm.xlu0 %235, %v214
        %v237 = vpop.permute.xlu0 %236
        %240 = vset.pattern.permute.xlu0 0
        %241 = vperm.xlu0 %240, %v215
        %v242 = vpop.permute.xlu0 %241
        %245 = vset.pattern.permute.xlu0 0
        %246 = vperm.xlu0 %245, %v216
        %v247 = vpop.permute.xlu0 %246
        %250 = vset.pattern.permute.xlu0 0
        %251 = vperm.xlu0 %250, %v217
        %v252 = vpop.permute.xlu0 %251
        %255 = vset.pattern.permute.xlu0 0
        %256 = vperm.xlu0 %255, %v218
        %v257 = vpop.permute.xlu0 %256
        %260 = vset.pattern.permute.xlu0 0
        %261 = vperm.xlu0 %260, %v219
        %v262 = vpop.permute.xlu0 %261
        %265 = vset.pattern.permute.xlu0 0
        %266 = vperm.xlu0 %265, %v220
        %v267 = vpop.permute.xlu0 %266
        %270 = vset.pattern.permute.xlu0 0
        %271 = vperm.xlu0 %270, %v221
        %v272 = vpop.permute.xlu0 %271
        %275 = vset.pattern.permute.xlu0 0
        %276 = vperm.xlu0 %275, %v222
        %v277 = vpop.permute.xlu0 %276
        %280 = vset.pattern.permute.xlu0 0
        %281 = vperm.xlu0 %280, %v223
        %v282 = vpop.permute.xlu0 %281
        %285 = vset.pattern.permute.xlu0 0
        %286 = vperm.xlu0 %285, %v224
        %v287 = vpop.permute.xlu0 %286
        %290 = vset.pattern.permute.xlu0 0
        %291 = vperm.xlu0 %290, %v225
        %v292 = vpop.permute.xlu0 %291
        %295 = vset.pattern.permute.xlu0 0
        %296 = vperm.xlu0 %295, %v226
        %v297 = vpop.permute.xlu0 %296
        %300 = vset.pattern.permute.xlu0 0
        %301 = vperm.xlu0 %300, %v227
        %v302 = vpop.permute.xlu0 %301
        %305 = vset.pattern.permute.xlu0 0
        %306 = vperm.xlu0 %305, %v228
        %v307 = vpop.permute.xlu0 %306
        %vm309 = vcmask 162816
        %v311 = vsel %vm309, %v194, 0
        %v314 = vsel %vm309, %v195, 0
        %v317 = vsel %vm309, %v196, 0
        %v320 = vsel %vm309, %v197, 0
        %v323 = vsel %vm309, %v198, 0
        %v326 = vsel %vm309, %v199, 0
        %v329 = vsel %vm309, %v200, 0
        %v332 = vsel %vm309, %v201, 0
        %v335 = vsel %vm309, %v202, 0
        %v338 = vsel %vm309, %v203, 0
        %v341 = vsel %vm309, %v204, 0
        %v344 = vsel %vm309, %v205, 0
        %v347 = vsel %vm309, %v206, 0
        %v350 = vsel %vm309, %v207, 0
        %v353 = vsel %vm309, %v208, 0
        %v356 = vsel %vm309, %v209, 0
        %vm358 = vcmask 1043456
        %v360 = vsel %vm358, %v212, 0
        %362 = vmatprep.subr.mxu0 0.0
        %363 = vmatpush1.msra.mxu0 %v210
        %364 = vmatprep.subr.mxu0 0.0
        %365 = vmatpush1.msra.mxu0 %v211
        %366 = vmatprep.subr.mxu0 0.0
        %367 = vmatpush1.msra.mxu0 %v360
        %368 = vmatprep.subr.mxu0 0.0
        %369 = vmatpush1.msra.mxu0 0.0
        %370 = vmatprep.subr.mxu0 0.0
        %371 = vmatpush1.msra.mxu0 0.0
        %372 = vmatprep.subr.mxu0 0.0
        %373 = vmatpush1.msra.mxu0 0.0
        %374 = vmatprep.subr.mxu0 0.0
        %375 = vmatpush1.msra.mxu0 0.0
        %376 = vmatprep.subr.mxu0 0.0
        %377 = vmatpush1.msra.mxu0 0.0
        %378 = vmatprep.subr.mxu0 0.0
        %379 = vmatpush1.msra.mxu0 0.0
        %380 = vmatprep.subr.mxu0 0.0
        %381 = vmatpush1.msra.mxu0 0.0
        %382 = vmatprep.subr.mxu0 0.0
        %383 = vmatpush1.msra.mxu0 0.0
        %384 = vmatprep.subr.mxu0 0.0
        %385 = vmatpush1.msra.mxu0 0.0
        %386 = vmatprep.subr.mxu0 0.0
        %387 = vmatpush1.msra.mxu0 0.0
        %388 = vmatprep.subr.mxu0 0.0
        %389 = vmatpush1.msra.mxu0 0.0
        %390 = vmatprep.subr.mxu0 0.0
        %391 = vmatpush1.msra.mxu0 0.0
        %392 = vmatprep.subr.mxu0 0.0
        %393 = vmatpush1.msra.mxu0 0.0
        %394 = vmatprep.subr.mxu0 0.0
        %395 = vmatpush1.msra.mxu0 0.0
        %396 = vmatprep.subr.mxu0 0.0
        %397 = vmatpush1.msra.mxu0 0.0
        %398 = vmatprep.subr.mxu0 0.0
        %399 = vmatpush1.msra.mxu0 0.0
        %400 = vmatprep.subr.mxu0 0.0
        %401 = vmatpush1.msra.mxu0 0.0
        %402 = vmatprep.subr.mxu0 0.0
        %403 = vmatpush1.msra.mxu0 0.0
        %404 = vmatprep.subr.mxu0 0.0
        %405 = vmatpush1.msra.mxu0 0.0
        %406 = vmatprep.subr.mxu0 0.0
        %407 = vmatpush1.msra.mxu0 0.0
        %408 = vmatprep.subr.mxu0 0.0
        %409 = vmatpush1.msra.mxu0 0.0
        %410 = vmatprep.subr.mxu0 0.0
        %411 = vmatpush1.msra.mxu0 0.0
        %412 = vmatprep.subr.mxu0 0.0
        %413 = vmatpush1.msra.mxu0 0.0
        %414 = vmatprep.subr.mxu0 0.0
        %415 = vmatpush1.msra.mxu0 0.0
        %416 = vmatprep.subr.mxu0 0.0
        %417 = vmatpush1.msra.mxu0 0.0
        %418 = vmatprep.subr.mxu0 0.0
        %419 = vmatpush1.msra.mxu0 0.0
        %420 = vmatprep.subr.mxu0 0.0
        %421 = vmatpush1.msra.mxu0 0.0
        %422 = vmatprep.subr.mxu0 0.0
        %423 = vmatpush1.msra.mxu0 0.0
        %424 = vmatprep.subr.mxu0 0.0
        %425 = vmatpush1.msra.mxu0 0.0
        %426 = vmatprep.mubr.f32.mxu0 0.0
        %427 = vmatmul.mubr.f32.gmra.mrb[0].mxu0 %v311
        %v428 = vpop.f32.mrb[0].mxu0
        %v429 = vadd.f32 %v232, %v428
        %v430 = vpop.f32.mrb[0].mxu0
        %431 = vmatprep.mubr.f32.mxu0 0.0
        %432 = vmatmul.mubr.f32.gmra.mrb[0].mxu0 %v314
        %v433 = vpop.f32.mrb[0].mxu0
        %v434 = vadd.f32 %v237, %v433
        %v435 = vpop.f32.mrb[0].mxu0
        %436 = vmatprep.mubr.f32.mxu0 0.0
        %437 = vmatmul.mubr.f32.gmra.mrb[0].mxu0 %v317
        %v438 = vpop.f32.mrb[0].mxu0
        %v439 = vadd.f32 %v242, %v438
        %v440 = vpop.f32.mrb[0].mxu0
        %441 = vmatprep.mubr.f32.mxu0 0.0
        %442 = vmatmul.mubr.f32.gmra.mrb[0].mxu0 %v320
        %v443 = vpop.f32.mrb[0].mxu0
        %v444 = vadd.f32 %v247, %v443
        %v445 = vpop.f32.mrb[0].mxu0
        %446 = vmatprep.mubr.f32.mxu0 0.0
        %447 = vmatmul.mubr.f32.gmra.mrb[0].mxu0 %v323
        %v448 = vpop.f32.mrb[0].mxu0
        %v449 = vadd.f32 %v252, %v448
        %v450 = vpop.f32.mrb[0].mxu0
        %451 = vmatprep.mubr.f32.mxu0 0.0
        %452 = vmatmul.mubr.f32.gmra.mrb[0].mxu0 %v326
        %v453 = vpop.f32.mrb[0].mxu0
        %v454 = vadd.f32 %v257, %v453
        %v455 = vpop.f32.mrb[0].mxu0
        %456 = vmatprep.mubr.f32.mxu0 0.0
        %457 = vmatmul.mubr.f32.gmra.mrb[0].mxu0 %v329
        %v458 = vpop.f32.mrb[0].mxu0
        %v459 = vadd.f32 %v262, %v458
        %v460 = vpop.f32.mrb[0].mxu0
        %461 = vmatprep.mubr.f32.mxu0 0.0
        %462 = vmatmul.mubr.f32.gmra.mrb[0].mxu0 %v332
        %v463 = vpop.f32.mrb[0].mxu0
        %v464 = vadd.f32 %v267, %v463
        %v465 = vpop.f32.mrb[0].mxu0
        %466 = vmatprep.mubr.f32.mxu0 0.0
        %467 = vmatmul.mubr.f32.gmra.mrb[0].mxu0 %v335
        %v468 = vpop.f32.mrb[0].mxu0
        %v469 = vadd.f32 %v272, %v468
        %v470 = vpop.f32.mrb[0].mxu0
        %471 = vmatprep.mubr.f32.mxu0 0.0
        %472 = vmatmul.mubr.f32.gmra.mrb[0].mxu0 %v338
        %v473 = vpop.f32.mrb[0].mxu0
        %v474 = vadd.f32 %v277, %v473
        %v475 = vpop.f32.mrb[0].mxu0
        %476 = vmatprep.mubr.f32.mxu0 0.0
        %477 = vmatmul.mubr.f32.gmra.mrb[0].mxu0 %v341
        %v478 = vpop.f32.mrb[0].mxu0
        %v479 = vadd.f32 %v282, %v478
        %v480 = vpop.f32.mrb[0].mxu0
        %481 = vmatprep.mubr.f32.mxu0 0.0
        %482 = vmatmul.mubr.f32.gmra.mrb[0].mxu0 %v344
        %v483 = vpop.f32.mrb[0].mxu0
        %v484 = vadd.f32 %v287, %v483
        %v485 = vpop.f32.mrb[0].mxu0
        %486 = vmatprep.mubr.f32.mxu0 0.0
        %487 = vmatmul.mubr.f32.gmra.mrb[0].mxu0 %v347
        %v488 = vpop.f32.mrb[0].mxu0
        %v489 = vadd.f32 %v292, %v488
        %v490 = vpop.f32.mrb[0].mxu0
        %491 = vmatprep.mubr.f32.mxu0 0.0
        %492 = vmatmul.mubr.f32.gmra.mrb[0].mxu0 %v350
        %v493 = vpop.f32.mrb[0].mxu0
        %v494 = vadd.f32 %v297, %v493
        %v495 = vpop.f32.mrb[0].mxu0
        %496 = vmatprep.mubr.f32.mxu0 0.0
        %497 = vmatmul.mubr.f32.gmra.mrb[0].mxu0 %v353
        %v498 = vpop.f32.mrb[0].mxu0
        %v499 = vadd.f32 %v302, %v498
        %v500 = vpop.f32.mrb[0].mxu0
        %501 = vmatprep.mubr.f32.mxu0 0.0
        %502 = vmatmul.mubr.f32.gmra.mrb[0].mxu0 %v356
        %v503 = vpop.f32.mrb[0].mxu0
        %v504 = vadd.f32 %v307, %v503
        %v505 = vpop.f32.mrb[0].mxu0
        %506 = vdwg.mxu0
        %507 = vst [vmem:[%s185] sm:$0xff] %v429
        %508 = vst [vmem:[%s185 + $0x8] sm:$0xff] %v434
        %509 = vst [vmem:[%s185 + $0x10] sm:$0xff] %v439
        %510 = vst [vmem:[%s185 + $0x18] sm:$0xff] %v444
        %511 = vst [vmem:[%s185 + $0x20] sm:$0xff] %v449
        %512 = vst [vmem:[%s185 + $0x28] sm:$0xff] %v454
        %513 = vst [vmem:[%s185 + $0x30] sm:$0xff] %v459
        %514 = vst [vmem:[%s185 + $0x38] sm:$0xff] %v464
        %515 = vst [vmem:[%s185 + $0x40] sm:$0xff] %v469
        %516 = vst [vmem:[%s185 + $0x48] sm:$0xff] %v474
        %517 = vst [vmem:[%s185 + $0x50] sm:$0xff] %v479
        %518 = vst [vmem:[%s185 + $0x58] sm:$0xff] %v484
        %519 = vst [vmem:[%s185 + $0x60] sm:$0xff] %v489
        %520 = vst [vmem:[%s185 + $0x68] sm:$0xff] %v494
        %521 = vst [vmem:[%s185 + $0x70] sm:$0xff] %v499
        %522 = vst [vmem:[%s185 + $0x78] sm:$0xff] %v504
        %s523 = sand.u32 %s109, 1
        %s524 = scalar_lea.sflag [#allocation3], %s523
        %s525 = sand.u32 %s109, 1
        %s526 = smul.addr %s525, 128
        %s527 = scalar_lea.vmem [#allocation2], %s526
        // Predicated region
        $region33: #{tpu_custom_call.1} parent=31 // pred_check
          %p528 = pneg %p119
        $region34: #{tpu_custom_call.1} parent=31 // pred_check_branch
          %530 = sbr.rel (%p528) target = $region36
        $region35: #{tpu_custom_call.1} parent=31 // pred_region
          %s532 = ssub.s32 2048, 2048
          %533 = vsyncadd %s524, %s532
          %s534 = smul.addr %s21, 16
          %s535 = sadd.s32 %s22, %s534
          %s536 = smul.addr %s535, 128
          %s537 = scalar_lea.hbm %s3, %s536
          %s538 = sshll.u32 %s527, 4
          %s539 = int_to_ptr.vmem [resolvable:$true] %s538
          %544 = dma.vmem_to_hbm [thread:$0]  %s539, 2048, %s537, %s524, 128, 128, 8
        $region36: #{tpu_custom_call.1} parent=31 // pred_fallthru
          _
      $region32: #{tpu_custom_call.1} parent=5 // pred_fallthru
        _
      %p545 = scmp.le.s32.totalorder 2, %s12
      // Predicated region
      $region37: #{tpu_custom_call.1} parent=5 // pred_check
        %p546 = pneg %p545
      $region38: #{tpu_custom_call.1} parent=5 // pred_check_branch
        %548 = sbr.rel (%p546) target = $region40
      $region39: #{tpu_custom_call.1} parent=5 // pred_region
        %s549 = ssub.s32 %s12, 2
        // Predicated region
        $region41: #{tpu_custom_call.1} parent=39 // pred_check
          %p550 = pneg %p125
        $region42: #{tpu_custom_call.1} parent=39 // pred_check_branch
          %552 = sbr.rel (%p550) target = $region44
        $region43: #{tpu_custom_call.1} parent=39 // pred_region
          %s553 = sand.u32 %s110, 1
          %s554 = scalar_lea.sflag [#allocation3], %s553
          %s555 = sand.u32 %s110, 1
          %s556 = smul.addr %s555, 128
          %s557 = scalar_lea.vmem [#allocation2], %s556
          %558 = dma.done %s554, 2048
        $region44: #{tpu_custom_call.1} parent=39 // pred_fallthru
          _
      $region40: #{tpu_custom_call.1} parent=5 // pred_fallthru
        _
    $region6: #{tpu_custom_call.1} parent=1 // loop_footer
      %s16 = sadd.s32 1, %s12
    $region7: #{tpu_custom_call.1} parent=1 // loop_footer_branch
      %11 = sbr.rel target = $region3
    $region8: #{tpu_custom_call.1} parent=1 // loop_exit
      _
    %559 = vsyncpa [#allocation3], 1
    %s560 = scalar_lea.sflag [#allocation3], 1
    %561 = vsyncpa %s560, 1

</llo_original>
